<compile_context>
chip_gen: v6e
topology: v6e:2x2x1
jax: 0.10.0
libtpu: 0.0.40
codegen_flags: <defaults>
</compile_context>

<pallas_src>
import functools

import jax
import jax.numpy as jnp
from jax.experimental import pallas as pl
from jax.experimental.pallas import tpu as pltpu

_LANE = 128
_SUBLANE = 8
_MAX_BATCH_TILE = 512


def _round_up(x, m):
    return (x + m - 1) // m * m


# ---------------------------------------------------------------------------
# Kernel
# ---------------------------------------------------------------------------
def _mlp_kernel(x_ref, w0_ref, b0_ref, w1_ref, b1_ref, w2_ref, b2_ref, o_ref,
                *, n_outputs):
    x = x_ref[...]
    mm_dtype = w0_ref.dtype  # f32 by default; bf16 if padded params are bf16

    # fc0 + relu   (image_size -> 100, padded to 128).  f32 accumulation.
    h0 = jnp.dot(x.astype(mm_dtype), w0_ref[...],
                 preferred_element_type=jnp.float32)
    h0 = jnp.maximum(h0 + b0_ref[...], 0.0)

    # dropout (eval mode) == identity

    # fc1 + relu   (100 -> 50, padded 128 -> 128)
    h1 = jnp.dot(h0.astype(mm_dtype), w1_ref[...],
                 preferred_element_type=jnp.float32)
    h1 = jnp.maximum(h1 + b1_ref[...], 0.0)

    # dropout (eval mode) == identity

    # fc2          (50 -> n_outputs, padded 128 -> 128)
    logits = jnp.dot(h1.astype(mm_dtype), w2_ref[...],
                     preferred_element_type=jnp.float32)
    logits = logits + b2_ref[...]

    # Mask padded output columns so they do not contribute to the softmax.
    # (-1e30, not -inf, so exp underflows to 0 without risking NaN.)
    col = jax.lax.broadcasted_iota(jnp.int32, logits.shape, dimension=1)
    logits = jnp.where(col < n_outputs, logits, jnp.float32(-1e30))

    # log_softmax over dim=1 (numerically stable).  Reductions -> XLU,
    # exp/log -> EUP: off the VALU critical slot, effectively free filler.
    m = jnp.max(logits, axis=-1, keepdims=True)
    shifted = logits - m
    lse = jnp.log(jnp.sum(jnp.exp(shifted), axis=-1, keepdims=True))
    o_ref[...] = (shifted - lse).astype(o_ref.dtype)


# ---------------------------------------------------------------------------
# Parameter padding (done ONCE, outside the per-forward path)
# ---------------------------------------------------------------------------
def pad_params(params, image_size, *, matmul_dtype=jnp.float32):
    """Zero-pad (in, out)-layout weights to lane/sublane multiples.

    `matmul_dtype=jnp.bfloat16` casts the weights only (MXU inputs); biases
    and all elementwise math stay float32.
    """
    w0, b0, w1, b1, w2, b2 = params
    d_in = _round_up(image_size, _LANE)
    h0p = _round_up(w0.shape[1], _LANE)   # 100 -> 128
    h1p = _round_up(w1.shape[1], _LANE)   # 50  -> 128
    op = _round_up(w2.shape[1], _LANE)    # n_outputs -> 128

    def pad_w(a, r, c):
        a = jnp.asarray(a, jnp.float32)
        return jnp.pad(a, ((0, r - a.shape[0]), (0, c - a.shape[1]))
                       ).astype(matmul_dtype)

    def pad_b(a, c):
        a = jnp.asarray(a, jnp.float32)[None, :]
        return jnp.pad(a, ((0, 0), (0, c - a.shape[1])))  # stays f32

    return (pad_w(w0, d_in, h0p), pad_b(b0, h0p),
            pad_w(w1, h0p, h1p), pad_b(b1, h1p),
            pad_w(w2, h1p, op), pad_b(b2, op))


# ---------------------------------------------------------------------------
# Batch-tile heuristic
# ---------------------------------------------------------------------------
def _choose_batch_tile(batch):
    b8 = _round_up(batch, _SUBLANE)
    if b8 <= _SUBLANE:
        return _SUBLANE
    if b8 <= 2 * _MAX_BATCH_TILE:
        # Split into (at least) 2 grid steps so v7x's dual TensorCores both
        # get work; tile stays a multiple of 8.
        return max(_SUBLANE, _round_up(pl.cdiv(b8, 2), _SUBLANE))
    return _MAX_BATCH_TILE


# ---------------------------------------------------------------------------
# Forward wrapper
# ---------------------------------------------------------------------------
def model_c_forward(x, padded_params, image_size, n_outputs, *,
                    batch_tile=None):
    """x: any shape giving (-1, image_size) after view; params from pad_params."""
    w0p, b0p, w1p, b1p, w2p, b2p = padded_params
    d_in, h0p = w0p.shape
    h1p = w1p.shape[1]
    op = w2p.shape[1]

    x2d = x.reshape(-1, image_size).astype(jnp.float32)
    batch = x2d.shape[0]

    # Only pad the sublane tail of the batch (and the lane tail of features);
    # no copy at all when already aligned (e.g. image_size=256, batch%8==0).
    b_pad = _round_up(batch, _SUBLANE)
    if b_pad != batch or d_in != image_size:
        xp = jnp.pad(x2d, ((0, b_pad - batch), (0, d_in - image_size)))
    else:
        xp = x2d

    if batch_tile is None:
        batch_tile = _choose_batch_tile(batch)
    batch_tile = min(batch_tile, b_pad)          # keep block <= array
    grid = (pl.cdiv(b_pad, batch_tile),)         # last tile may be partial

    whole = lambda i: (0, 0)   # constant index map -> weights stay resident

    out_padded = pl.pallas_call(
        functools.partial(_mlp_kernel, n_outputs=n_outputs),
        out_shape=jax.ShapeDtypeStruct((b_pad, op), jnp.float32),
        grid_spec=pltpu.PrefetchScalarGridSpec(
            num_scalar_prefetch=0,
            grid=grid,
            in_specs=[
                pl.BlockSpec((batch_tile, d_in), lambda i: (i, 0)),  # x tile
                pl.BlockSpec((d_in, h0p), whole),                    # w0
                pl.BlockSpec((1, h0p), whole),                       # b0
                pl.BlockSpec((h0p, h1p), whole),                     # w1
                pl.BlockSpec((1, h1p), whole),                       # b1
                pl.BlockSpec((h1p, op), whole),                      # w2
                pl.BlockSpec((1, op), whole),                        # b2
            ],
            out_specs=pl.BlockSpec((batch_tile, op), lambda i: (i, 0)),
        ),
        compiler_params=pltpu.CompilerParams(
            dimension_semantics=("parallel",)),
    )(xp, w0p, b0p, w1p, b1p, w2p, b2p)

    return out_padded[:batch, :n_outputs]


# ---------------------------------------------------------------------------
# Deterministic parameter init (PyTorch nn.Linear style: U(-1/sqrt(fan_in), +))
# NOTE: weights are built as (fan_in, fan_out); PyTorch checkpoints are
# (out, in) and must be transposed before use here.
# ---------------------------------------------------------------------------
def init_params(key, image_size, n_outputs):
    dims = [(image_size, 100), (100, 50), (50, n_outputs)]
    params = []
    for (fan_in, fan_out) in dims:
        key, kw, kb = jax.random.split(key, 3)
        bound = 1.0 / jnp.sqrt(fan_in)
        w = jax.random.uniform(kw, (fan_in, fan_out), jnp.float32, -bound, bound)
        b = jax.random.uniform(kb, (fan_out,), jnp.float32, -bound, bound)
        params += [w, b]
    return tuple(params)


def reference_forward(x, params, image_size, n_outputs):
    w0, b0, w1, b1, w2, b2 = params
    out = x.reshape(-1, image_size).astype(jnp.float32)
    out = jnp.maximum(out @ w0 + b0, 0.0)
    out = jnp.maximum(out @ w1 + b1, 0.0)
    logits = out @ w2 + b2
    return jax.nn.log_softmax(logits, axis=1)


# ---------------------------------------------------------------------------
if __name__ == "__main__":
    key = jax.random.PRNGKey(0)
    image_size, n_outputs = 16 * 16, 10
    kx1, kx2, kp = jax.random.split(key, 3)

    params = init_params(kp, image_size, n_outputs)
    padded_f32 = pad_params(params, image_size)                       # once

    # --- Test 1: tiny batch (2), row-pad path, single grid step -----------
    x_small = jax.random.normal(kx1, (2, 1, 16, 16), jnp.float32)
    out1 = jax.block_until_ready(
        model_c_forward(x_small, padded_f32, image_size, n_outputs))
    ref1 = reference_forward(x_small, params, image_size, n_outputs)
    assert out1.shape == (2, n_outputs), out1.shape
    assert jnp.allclose(out1, ref1, atol=1e-5, rtol=1e-5), \
        float(jnp.max(jnp.abs(out1 - ref1)))

    # --- Test 2: larger batch (200), zero-copy x, 2 grid steps, partial tile
    x_big = jax.random.normal(kx2, (200, 1, 16, 16), jnp.float32)
    out2 = jax.block_until_ready(
        model_c_forward(x_big, padded_f32, image_size, n_outputs))
    ref2 = reference_forward(x_big, params, image_size, n_outputs)
    assert out2.shape == (200, n_outputs), out2.shape
    assert jnp.allclose(out2, ref2, atol=1e-5, rtol=1e-5), \
        float(jnp.max(jnp.abs(out2 - ref2)))

    # --- Test 3: optional bf16 MXU inputs (v6e/v7x path), loose tolerance --
    padded_bf16 = pad_params(params, image_size, matmul_dtype=jnp.bfloat16)
    out3 = jax.block_until_ready(
        model_c_forward(x_big, padded_bf16, image_size, n_outputs))
    assert out3.shape == (200, n_outputs), out3.shape
    assert bool(jnp.all(jnp.isfinite(out3)))
    assert jnp.allclose(out3, ref2, atol=1.5e-1, rtol=1e-1), \
        float(jnp.max(jnp.abs(out3 - ref2)))

    print("KERNEL_OK")
</pallas_src>

<mosaic_0001>
module attributes {stable_mosaic.version = 11 : i64} {
  func.func @_mlp_kernel(%arg0: i32, %arg1: memref<8x256xf32, #tpu.memory_space<vmem>>, %arg2: memref<256x128xf32, #tpu.memory_space<vmem>>, %arg3: memref<1x128xf32, #tpu.memory_space<vmem>>, %arg4: memref<128x128xf32, #tpu.memory_space<vmem>>, %arg5: memref<1x128xf32, #tpu.memory_space<vmem>>, %arg6: memref<128x128xf32, #tpu.memory_space<vmem>>, %arg7: memref<1x128xf32, #tpu.memory_space<vmem>>, %arg8: memref<8x128xf32, #tpu.memory_space<vmem>>) attributes {dimension_semantics = [#tpu.dimension_semantics<parallel>], iteration_bounds = array<i64: 1>, scalar_prefetch = 0 : i64, scratch_operands = 0 : i64, tpu.core_type = #tpu.core_type<tc>, window_params = [{transform_indices = @transform_0, window_bounds = array<i64: 8, 256>}, {pipeline_mode = #tpu.pipeline_mode<synchronous>, transform_indices = @transform_1, window_bounds = array<i64: 256, 128>}, {pipeline_mode = #tpu.pipeline_mode<synchronous>, transform_indices = @transform_2, window_bounds = array<i64: 1, 128>}, {pipeline_mode = #tpu.pipeline_mode<synchronous>, transform_indices = @transform_3, window_bounds = array<i64: 128, 128>}, {pipeline_mode = #tpu.pipeline_mode<synchronous>, transform_indices = @transform_4, window_bounds = array<i64: 1, 128>}, {pipeline_mode = #tpu.pipeline_mode<synchronous>, transform_indices = @transform_5, window_bounds = array<i64: 128, 128>}, {pipeline_mode = #tpu.pipeline_mode<synchronous>, transform_indices = @transform_6, window_bounds = array<i64: 1, 128>}, {transform_indices = @transform_7, window_bounds = array<i64: 8, 128>}]} {
    %c0 = arith.constant 0 : index
    %c0_0 = arith.constant 0 : index
    %0 = vector.load %arg1[%c0, %c0_0] : memref<8x256xf32, #tpu.memory_space<vmem>>, vector<8x256xf32>
    %c0_1 = arith.constant 0 : index
    %c0_2 = arith.constant 0 : index
    %1 = vector.load %arg2[%c0_1, %c0_2] : memref<256x128xf32, #tpu.memory_space<vmem>>, vector<256x128xf32>
    %cst = arith.constant dense<0.000000e+00> : vector<8x128xf32>
    %2 = tpu.matmul %0, %1, %cst {dimension_numbers = #tpu.dot_dimension_numbers<[1], [0], [0], [1], [0, 0, 1, 1], [], []>} : vector<8x256xf32>, vector<256x128xf32>, vector<8x128xf32> -> vector<8x128xf32>
    %c0_3 = arith.constant 0 : index
    %c0_4 = arith.constant 0 : index
    %3 = vector.load %arg3[%c0_3, %c0_4] : memref<1x128xf32, #tpu.memory_space<vmem>>, vector<1x128xf32>
    %4 = vector.broadcast %3 : vector<1x128xf32> to vector<8x128xf32>
    %5 = arith.addf %2, %4 : vector<8x128xf32>
    %cst_5 = arith.constant 0.000000e+00 : f32
    %6 = vector.broadcast %cst_5 : f32 to vector<8x128xf32>
    %7 = arith.maximumf %5, %6 : vector<8x128xf32>
    %c0_6 = arith.constant 0 : index
    %c0_7 = arith.constant 0 : index
    %8 = vector.load %arg4[%c0_6, %c0_7] : memref<128x128xf32, #tpu.memory_space<vmem>>, vector<128x128xf32>
    %cst_8 = arith.constant dense<0.000000e+00> : vector<8x128xf32>
    %9 = tpu.matmul %7, %8, %cst_8 {dimension_numbers = #tpu.dot_dimension_numbers<[1], [0], [0], [1], [0, 0, 1, 1], [], []>} : vector<8x128xf32>, vector<128x128xf32>, vector<8x128xf32> -> vector<8x128xf32>
    %c0_9 = arith.constant 0 : index
    %c0_10 = arith.constant 0 : index
    %10 = vector.load %arg5[%c0_9, %c0_10] : memref<1x128xf32, #tpu.memory_space<vmem>>, vector<1x128xf32>
    %11 = vector.broadcast %10 : vector<1x128xf32> to vector<8x128xf32>
    %12 = arith.addf %9, %11 : vector<8x128xf32>
    %cst_11 = arith.constant 0.000000e+00 : f32
    %13 = vector.broadcast %cst_11 : f32 to vector<8x128xf32>
    %14 = arith.maximumf %12, %13 : vector<8x128xf32>
    %c0_12 = arith.constant 0 : index
    %c0_13 = arith.constant 0 : index
    %15 = vector.load %arg6[%c0_12, %c0_13] : memref<128x128xf32, #tpu.memory_space<vmem>>, vector<128x128xf32>
    %cst_14 = arith.constant dense<0.000000e+00> : vector<8x128xf32>
    %16 = tpu.matmul %14, %15, %cst_14 {dimension_numbers = #tpu.dot_dimension_numbers<[1], [0], [0], [1], [0, 0, 1, 1], [], []>} : vector<8x128xf32>, vector<128x128xf32>, vector<8x128xf32> -> vector<8x128xf32>
    %c0_15 = arith.constant 0 : index
    %c0_16 = arith.constant 0 : index
    %17 = vector.load %arg7[%c0_15, %c0_16] : memref<1x128xf32, #tpu.memory_space<vmem>>, vector<1x128xf32>
    %18 = vector.broadcast %17 : vector<1x128xf32> to vector<8x128xf32>
    %19 = arith.addf %16, %18 : vector<8x128xf32>
    %20 = tpu.iota {dimensions = array<i32: 1>} : vector<8x128xi32>
    %c10_i32 = arith.constant 10 : i32
    %21 = vector.broadcast %c10_i32 : i32 to vector<8x128xi32>
    %22 = arith.cmpi slt, %20, %21 : vector<8x128xi32>
    %cst_17 = arith.constant -1.000000e+30 : f32
    %23 = vector.broadcast %cst_17 : f32 to vector<8x128xf32>
    %24 = arith.select %22, %19, %23 : vector<8x128xi1>, vector<8x128xf32>
    %cst_18 = arith.constant dense<0xFF800000> : vector<8xf32>
    %25 = vector.multi_reduction <maximumf>, %24, %cst_18 [1] : vector<8x128xf32> to vector<8xf32>
    %26 = vector.shape_cast %25 : vector<8xf32> to vector<8x1xf32>
    %27 = vector.broadcast %26 : vector<8x1xf32> to vector<8x128xf32>
    %28 = arith.subf %24, %27 : vector<8x128xf32>
    %29 = math.exp %28 : vector<8x128xf32>
    %cst_19 = arith.constant dense<0.000000e+00> : vector<8xf32>
    %30 = vector.multi_reduction <add>, %29, %cst_19 [1] : vector<8x128xf32> to vector<8xf32>
    %31 = vector.shape_cast %30 : vector<8xf32> to vector<8x1xf32>
    %32 = math.log %31 : vector<8x1xf32>
    %33 = vector.broadcast %32 : vector<8x1xf32> to vector<8x128xf32>
    %34 = arith.subf %28, %33 : vector<8x128xf32>
    %c0_20 = arith.constant 0 : index
    %c0_21 = arith.constant 0 : index
    %35 = vector.load %arg8[%c0_20, %c0_21] : memref<8x128xf32, #tpu.memory_space<vmem>>, vector<8x128xf32>
    tpu.vector_store %arg8[%c0_20, %c0_21], %34 {strides = array<i32>} : memref<8x128xf32, #tpu.memory_space<vmem>>, vector<8x128xf32>,
    return
  }
  func.func @transform_0(%arg0: i32) -> (i32, i32) {
    %c0_i32 = arith.constant 0 : i32
    %c0_i32_0 = arith.constant 0 : i32
    return %arg0, %c0_i32 : i32, i32
  }
  func.func @transform_1(%arg0: i32) -> (i32, i32) {
    %c0_i32 = arith.constant 0 : i32
    %c0_i32_0 = arith.constant 0 : i32
    %c0_i32_1 = arith.constant 0 : i32
    return %c0_i32, %c0_i32_0 : i32, i32
  }
  func.func @transform_2(%arg0: i32) -> (i32, i32) {
    %c0_i32 = arith.constant 0 : i32
    %c0_i32_0 = arith.constant 0 : i32
    %c0_i32_1 = arith.constant 0 : i32
    return %c0_i32, %c0_i32_0 : i32, i32
  }
  func.func @transform_3(%arg0: i32) -> (i32, i32) {
    %c0_i32 = arith.constant 0 : i32
    %c0_i32_0 = arith.constant 0 : i32
    %c0_i32_1 = arith.constant 0 : i32
    return %c0_i32, %c0_i32_0 : i32, i32
  }
  func.func @transform_4(%arg0: i32) -> (i32, i32) {
    %c0_i32 = arith.constant 0 : i32
    %c0_i32_0 = arith.constant 0 : i32
    %c0_i32_1 = arith.constant 0 : i32
    return %c0_i32, %c0_i32_0 : i32, i32
  }
  func.func @transform_5(%arg0: i32) -> (i32, i32) {
    %c0_i32 = arith.constant 0 : i32
    %c0_i32_0 = arith.constant 0 : i32
    %c0_i32_1 = arith.constant 0 : i32
    return %c0_i32, %c0_i32_0 : i32, i32
  }
  func.func @transform_6(%arg0: i32) -> (i32, i32) {
    %c0_i32 = arith.constant 0 : i32
    %c0_i32_0 = arith.constant 0 : i32
    %c0_i32_1 = arith.constant 0 : i32
    return %c0_i32, %c0_i32_0 : i32, i32
  }
  func.func @transform_7(%arg0: i32) -> (i32, i32) {
    %c0_i32 = arith.constant 0 : i32
    %c0_i32_0 = arith.constant 0 : i32
    return %arg0, %c0_i32 : i32, i32
  }
}

</mosaic_0001>

<llo_original>
// kernel: tpu_custom_call.1
$region0: #{tpu_custom_call.1}
  #allocation0 [shape = 'u32[]', space=smem, size = 0x4, offset = 0x4, fixed_abs, tag = 'smem constant byte address 0x4 - core index']
  #allocation1 [shape = 'u32[144,128]{1,0:T(1,128)}', space=vmem, size = 0x12000, scoped, tag = 'internal scratch']
  %s0 = inlined_call_operand.hbm [shape: f32[8,256], index: 0, kind: input, shape index: {}]
  %s1 = inlined_call_operand.hbm [shape: f32[256,128], index: 1, kind: input, shape index: {}]
  %s2 = inlined_call_operand.vmem [shape: f32[1,128], index: 2, kind: input, shape index: {}]
  %s3 = inlined_call_operand.hbm [shape: f32[128,128], index: 3, kind: input, shape index: {}]
  %s4 = inlined_call_operand.vmem [shape: f32[1,128], index: 4, kind: input, shape index: {}]
  %s5 = inlined_call_operand.hbm [shape: f32[128,128], index: 5, kind: input, shape index: {}]
  %s6 = inlined_call_operand.vmem [shape: f32[1,128], index: 6, kind: input, shape index: {}]
  %s7 = inlined_call_operand.hbm [shape: f32[8,128], index: 7, kind: output, shape index: {}]
  %s8 = sld [smem:[#allocation0]]
  $region54: #{tpu_custom_call.1} parent=0
    _
  %s10 = ssub.s32 1, %s8
  %s11 = scalar_select 0, %s10, %s8
  $region1: #{tpu_custom_call.1} parent=0
    #allocation2 [shape = 'u8[8192]{0}', space=vmem, size = 0x2000, scoped, tag = 'input window, operand 0, single buffered']
    #allocation3 [shape = 's32[1]{0}', space=sflag, size = 0x4, scoped, tag = 'scoped memory for tpu_custom_call.1']
    #allocation4 [shape = 's32[1]{0}', space=sflag, size = 0x4, scoped, tag = 'scoped memory for tpu_custom_call.1']
    #allocation5 [shape = 'u8[131072]{0}', space=vmem, size = 0x20000, scoped, tag = 'input window, operand 1, single buffered']
    #allocation6 [shape = 's32[1]{0}', space=sflag, size = 0x4, scoped, tag = 'scoped memory for tpu_custom_call.1']
    #allocation7 [shape = 'u8[65536]{0}', space=vmem, size = 0x10000, scoped, tag = 'input window, operand 3, single buffered']
    #allocation8 [shape = 'u8[65536]{0}', space=vmem, size = 0x10000, scoped, tag = 'input window, operand 5, single buffered']
    #allocation9 [shape = 's32[1]{0}', space=sflag, size = 0x4, scoped, tag = 'scoped memory for tpu_custom_call.1']
    #allocation10 [shape = 'u8[4096]{0}', space=vmem, size = 0x1000, scoped, tag = 'output window, operand 0, single buffered']
    %12 = vsyncpa [#allocation3], 0
    %13 = vsyncpa [#allocation6], 0
    %14 = vsyncpa [#allocation9], 0
    %15 = vsyncpa [#allocation4], 0
    // Predicated region
    $region2: #{tpu_custom_call.1} parent=1 // pred_check
      _
    $region3: #{tpu_custom_call.1} parent=1 // pred_check_branch
      %17 = sbr.rel (0) target = $region5
    $region4: #{tpu_custom_call.1} parent=1 // pred_region
      %s19 = ssub.s32 256, 256
      %20 = vsyncadd [#allocation3], %s19
      %s22 = sshll.u32 [#allocation2], 4
      %s23 = int_to_ptr.vmem [resolvable:$true] %s22
      %25 = dma.hbm_to_vmem [thread:$0]  %s0, 256, %s23, [#allocation3]
    $region5: #{tpu_custom_call.1} parent=1 // pred_fallthru
      _
    // Predicated region
    $region6: #{tpu_custom_call.1} parent=1 // pred_check
      _
    $region7: #{tpu_custom_call.1} parent=1 // pred_check_branch
      %27 = sbr.rel (0) target = $region9
    $region8: #{tpu_custom_call.1} parent=1 // pred_region
      %s29 = ssub.s32 4096, 4096
      %30 = vsyncadd [#allocation6], %s29
      %s31 = sshll.u32 [#allocation5], 4
      %s32 = int_to_ptr.vmem [resolvable:$true] %s31
      %37 = dma.hbm_to_vmem [thread:$0]  %s1, 4096, %s32, [#allocation6], 128, 128, 8
    $region9: #{tpu_custom_call.1} parent=1 // pred_fallthru
      _
    // Predicated region
    $region10: #{tpu_custom_call.1} parent=1 // pred_check
      _
    $region11: #{tpu_custom_call.1} parent=1 // pred_check_branch
      %39 = sbr.rel (0) target = $region13
    $region12: #{tpu_custom_call.1} parent=1 // pred_region
      _
    $region13: #{tpu_custom_call.1} parent=1 // pred_fallthru
      _
    // Predicated region
    $region14: #{tpu_custom_call.1} parent=1 // pred_check
      _
    $region15: #{tpu_custom_call.1} parent=1 // pred_check_branch
      %41 = sbr.rel (0) target = $region17
    $region16: #{tpu_custom_call.1} parent=1 // pred_region
      %s43 = ssub.s32 2048, 2048
      %44 = vsyncadd [#allocation6], %s43
      %s45 = sshll.u32 [#allocation7], 4
      %s46 = int_to_ptr.vmem [resolvable:$true] %s45
      %51 = dma.hbm_to_vmem [thread:$0]  %s3, 2048, %s46, [#allocation6], 128, 128, 8
    $region17: #{tpu_custom_call.1} parent=1 // pred_fallthru
      _
    // Predicated region
    $region18: #{tpu_custom_call.1} parent=1 // pred_check
      _
    $region19: #{tpu_custom_call.1} parent=1 // pred_check_branch
      %53 = sbr.rel (0) target = $region21
    $region20: #{tpu_custom_call.1} parent=1 // pred_region
      _
    $region21: #{tpu_custom_call.1} parent=1 // pred_fallthru
      _
    // Predicated region
    $region22: #{tpu_custom_call.1} parent=1 // pred_check
      _
    $region23: #{tpu_custom_call.1} parent=1 // pred_check_branch
      %55 = sbr.rel (0) target = $region25
    $region24: #{tpu_custom_call.1} parent=1 // pred_region
      %s57 = ssub.s32 2048, 2048
      %58 = vsyncadd [#allocation9], %s57
      %s59 = sshll.u32 [#allocation8], 4
      %s60 = int_to_ptr.vmem [resolvable:$true] %s59
      %65 = dma.hbm_to_vmem [thread:$0]  %s5, 2048, %s60, [#allocation9], 128, 128, 8
    $region25: #{tpu_custom_call.1} parent=1 // pred_fallthru
      _
    // Predicated region
    $region26: #{tpu_custom_call.1} parent=1 // pred_check
      _
    $region27: #{tpu_custom_call.1} parent=1 // pred_check_branch
      %67 = sbr.rel (0) target = $region29
    $region28: #{tpu_custom_call.1} parent=1 // pred_region
      _
    $region29: #{tpu_custom_call.1} parent=1 // pred_fallthru
      _
    // Predicated region
    $region30: #{tpu_custom_call.1} parent=1 // pred_check
      _
    $region31: #{tpu_custom_call.1} parent=1 // pred_check_branch
      %69 = sbr.rel (0) target = $region33
    $region32: #{tpu_custom_call.1} parent=1 // pred_region
      %70 = dma.done [#allocation3], 256
    $region33: #{tpu_custom_call.1} parent=1 // pred_fallthru
      _
    // Predicated region
    $region34: #{tpu_custom_call.1} parent=1 // pred_check
      _
    $region35: #{tpu_custom_call.1} parent=1 // pred_check_branch
      %72 = sbr.rel (0) target = $region37
    $region36: #{tpu_custom_call.1} parent=1 // pred_region
      %73 = dma.done [#allocation6], 4096
    $region37: #{tpu_custom_call.1} parent=1 // pred_fallthru
      _
    // Predicated region
    $region38: #{tpu_custom_call.1} parent=1 // pred_check
      _
    $region39: #{tpu_custom_call.1} parent=1 // pred_check_branch
      %75 = sbr.rel (0) target = $region41
    $region40: #{tpu_custom_call.1} parent=1 // pred_region
      %76 = dma.done [#allocation6], 2048
    $region41: #{tpu_custom_call.1} parent=1 // pred_fallthru
      _
    // Predicated region
    $region42: #{tpu_custom_call.1} parent=1 // pred_check
      _
    $region43: #{tpu_custom_call.1} parent=1 // pred_check_branch
      %78 = sbr.rel (0) target = $region45
    $region44: #{tpu_custom_call.1} parent=1 // pred_region
      %79 = dma.done [#allocation9], 2048
    $region45: #{tpu_custom_call.1} parent=1 // pred_fallthru
      _
    %v80 = vld [vmem:[#allocation2] sm:$0xff]
    %v81 = vld [vmem:[#allocation2 + $0x8] sm:$0xff]
    %v82 = vld [vmem:[#allocation5] sm:$0xff]
    %v83 = vld [vmem:[#allocation5 + $0x8] sm:$0xff]
    %v84 = vld [vmem:[#allocation5 + $0x10] sm:$0xff]
    %v85 = vld [vmem:[#allocation5 + $0x18] sm:$0xff]
    %v86 = vld [vmem:[#allocation5 + $0x20] sm:$0xff]
    %v87 = vld [vmem:[#allocation5 + $0x28] sm:$0xff]
    %v88 = vld [vmem:[#allocation5 + $0x30] sm:$0xff]
    %v89 = vld [vmem:[#allocation5 + $0x38] sm:$0xff]
    %v90 = vld [vmem:[#allocation5 + $0x40] sm:$0xff]
    %v91 = vld [vmem:[#allocation5 + $0x48] sm:$0xff]
    %v92 = vld [vmem:[#allocation5 + $0x50] sm:$0xff]
    %v93 = vld [vmem:[#allocation5 + $0x58] sm:$0xff]
    %v94 = vld [vmem:[#allocation5 + $0x60] sm:$0xff]
    %v95 = vld [vmem:[#allocation5 + $0x68] sm:$0xff]
    %v96 = vld [vmem:[#allocation5 + $0x70] sm:$0xff]
    %v97 = vld [vmem:[#allocation5 + $0x78] sm:$0xff]
    %v98 = vld [vmem:[#allocation5 + $0x80] sm:$0xff]
    %v99 = vld [vmem:[#allocation5 + $0x88] sm:$0xff]
    %v100 = vld [vmem:[#allocation5 + $0x90] sm:$0xff]
    %v101 = vld [vmem:[#allocation5 + $0x98] sm:$0xff]
    %v102 = vld [vmem:[#allocation5 + $0xa0] sm:$0xff]
    %v103 = vld [vmem:[#allocation5 + $0xa8] sm:$0xff]
    %v104 = vld [vmem:[#allocation5 + $0xb0] sm:$0xff]
    %v105 = vld [vmem:[#allocation5 + $0xb8] sm:$0xff]
    %v106 = vld [vmem:[#allocation5 + $0xc0] sm:$0xff]
    %v107 = vld [vmem:[#allocation5 + $0xc8] sm:$0xff]
    %v108 = vld [vmem:[#allocation5 + $0xd0] sm:$0xff]
    %v109 = vld [vmem:[#allocation5 + $0xd8] sm:$0xff]
    %v110 = vld [vmem:[#allocation5 + $0xe0] sm:$0xff]
    %v111 = vld [vmem:[#allocation5 + $0xe8] sm:$0xff]
    %v112 = vld [vmem:[#allocation5 + $0xf0] sm:$0xff]
    %v113 = vld [vmem:[#allocation5 + $0xf8] sm:$0xff]
    %v114 = vld [vmem:[%s2] sm:$0x1]
    %v116 = vlaneseq
    %v117 = vshrl.u32 %v116, 7
    %v118 = vsub.s32 0, %v117
    %v119 = vrot.slane %v114, %v118
    %121 = vmatprep.subr.mxu0 0.0
    %122 = vmatpush1.msra.mxu0 %v97
    %123 = vmatprep.subr.mxu0 0.0
    %124 = vmatpush1.msra.mxu0 %v96
    %125 = vmatprep.subr.mxu0 0.0
    %126 = vmatpush1.msra.mxu0 %v95
    %127 = vmatprep.subr.mxu0 0.0
    %128 = vmatpush1.msra.mxu0 %v94
    %129 = vmatprep.subr.mxu0 0.0
    %130 = vmatpush1.msra.mxu0 %v93
    %131 = vmatprep.subr.mxu0 0.0
    %132 = vmatpush1.msra.mxu0 %v92
    %133 = vmatprep.subr.mxu0 0.0
    %134 = vmatpush1.msra.mxu0 %v91
    %135 = vmatprep.subr.mxu0 0.0
    %136 = vmatpush1.msra.mxu0 %v90
    %137 = vmatprep.subr.mxu0 0.0
    %138 = vmatpush1.msra.mxu0 %v89
    %139 = vmatprep.subr.mxu0 0.0
    %140 = vmatpush1.msra.mxu0 %v88
    %141 = vmatprep.subr.mxu0 0.0
    %142 = vmatpush1.msra.mxu0 %v87
    %143 = vmatprep.subr.mxu0 0.0
    %144 = vmatpush1.msra.mxu0 %v86
    %145 = vmatprep.subr.mxu0 0.0
    %146 = vmatpush1.msra.mxu0 %v85
    %147 = vmatprep.subr.mxu0 0.0
    %148 = vmatpush1.msra.mxu0 %v84
    %149 = vmatprep.subr.mxu0 0.0
    %150 = vmatpush1.msra.mxu0 %v83
    %151 = vmatprep.subr.mxu0 0.0
    %152 = vmatpush1.msra.mxu0 %v82
    %153 = vmatprep.subr.mxu0 0.0
    %154 = vmatpush2.msra.mxu0 %v113
    %155 = vmatprep.subr.mxu0 0.0
    %156 = vmatpush2.msra.mxu0 %v112
    %157 = vmatprep.subr.mxu0 0.0
    %158 = vmatpush2.msra.mxu0 %v111
    %159 = vmatprep.subr.mxu0 0.0
    %160 = vmatpush2.msra.mxu0 %v110
    %161 = vmatprep.subr.mxu0 0.0
    %162 = vmatpush2.msra.mxu0 %v109
    %163 = vmatprep.subr.mxu0 0.0
    %164 = vmatpush2.msra.mxu0 %v108
    %165 = vmatprep.subr.mxu0 0.0
    %166 = vmatpush2.msra.mxu0 %v107
    %167 = vmatprep.subr.mxu0 0.0
    %168 = vmatpush2.msra.mxu0 %v106
    %169 = vmatprep.subr.mxu0 0.0
    %170 = vmatpush2.msra.mxu0 %v105
    %171 = vmatprep.subr.mxu0 0.0
    %172 = vmatpush2.msra.mxu0 %v104
    %173 = vmatprep.subr.mxu0 0.0
    %174 = vmatpush2.msra.mxu0 %v103
    %175 = vmatprep.subr.mxu0 0.0
    %176 = vmatpush2.msra.mxu0 %v102
    %177 = vmatprep.subr.mxu0 0.0
    %178 = vmatpush2.msra.mxu0 %v101
    %179 = vmatprep.subr.mxu0 0.0
    %180 = vmatpush2.msra.mxu0 %v100
    %181 = vmatprep.subr.mxu0 0.0
    %182 = vmatpush2.msra.mxu0 %v99
    %183 = vmatprep.subr.mxu0 0.0
    %184 = vmatpush2.msra.mxu0 %v98
    %185 = vmatprep.mubr.f32.mxu0 %v81
    %186 = vmatmul.mubr.f32.gmra.mxu0 %v80
    %v187 = vpop.f32.mrf.mxu0
    %v188 = vadd.f32 %v119, %v187
    %v189 = vpop.f32.mrf.mxu0
    %190 = vdwg.mxu0
    %v191 = vmax.f32 %v188, 0.0
    %v192 = vld [vmem:[#allocation7] sm:$0xff]
    %v193 = vld [vmem:[#allocation7 + $0x8] sm:$0xff]
    %v194 = vld [vmem:[#allocation7 + $0x10] sm:$0xff]
    %v195 = vld [vmem:[#allocation7 + $0x18] sm:$0xff]
    %v196 = vld [vmem:[#allocation7 + $0x20] sm:$0xff]
    %v197 = vld [vmem:[#allocation7 + $0x28] sm:$0xff]
    %v198 = vld [vmem:[#allocation7 + $0x30] sm:$0xff]
    %v199 = vld [vmem:[#allocation7 + $0x38] sm:$0xff]
    %v200 = vld [vmem:[#allocation7 + $0x40] sm:$0xff]
    %v201 = vld [vmem:[#allocation7 + $0x48] sm:$0xff]
    %v202 = vld [vmem:[#allocation7 + $0x50] sm:$0xff]
    %v203 = vld [vmem:[#allocation7 + $0x58] sm:$0xff]
    %v204 = vld [vmem:[#allocation7 + $0x60] sm:$0xff]
    %v205 = vld [vmem:[#allocation7 + $0x68] sm:$0xff]
    %v206 = vld [vmem:[#allocation7 + $0x70] sm:$0xff]
    %v207 = vld [vmem:[#allocation7 + $0x78] sm:$0xff]
    %v208 = vld [vmem:[%s4] sm:$0x1]
    %v210 = vlaneseq
    %v211 = vshrl.u32 %v210, 7
    %v212 = vsub.s32 0, %v211
    %v213 = vrot.slane %v208, %v212
    %215 = vmatprep.subr.mxu0 0.0
    %216 = vmatpush1.msra.mxu0 %v207
    %217 = vmatprep.subr.mxu0 0.0
    %218 = vmatpush1.msra.mxu0 %v206
    %219 = vmatprep.subr.mxu0 0.0
    %220 = vmatpush1.msra.mxu0 %v205
    %221 = vmatprep.subr.mxu0 0.0
    %222 = vmatpush1.msra.mxu0 %v204
    %223 = vmatprep.subr.mxu0 0.0
    %224 = vmatpush1.msra.mxu0 %v203
    %225 = vmatprep.subr.mxu0 0.0
    %226 = vmatpush1.msra.mxu0 %v202
    %227 = vmatprep.subr.mxu0 0.0
    %228 = vmatpush1.msra.mxu0 %v201
    %229 = vmatprep.subr.mxu0 0.0
    %230 = vmatpush1.msra.mxu0 %v200
    %231 = vmatprep.subr.mxu0 0.0
    %232 = vmatpush1.msra.mxu0 %v199
    %233 = vmatprep.subr.mxu0 0.0
    %234 = vmatpush1.msra.mxu0 %v198
    %235 = vmatprep.subr.mxu0 0.0
    %236 = vmatpush1.msra.mxu0 %v197
    %237 = vmatprep.subr.mxu0 0.0
    %238 = vmatpush1.msra.mxu0 %v196
    %239 = vmatprep.subr.mxu0 0.0
    %240 = vmatpush1.msra.mxu0 %v195
    %241 = vmatprep.subr.mxu0 0.0
    %242 = vmatpush1.msra.mxu0 %v194
    %243 = vmatprep.subr.mxu0 0.0
    %244 = vmatpush1.msra.mxu0 %v193
    %245 = vmatprep.subr.mxu0 0.0
    %246 = vmatpush1.msra.mxu0 %v192
    %247 = vmatprep.subr.mxu0 0.0
    %248 = vmatpush2.msra.mxu0 0.0
    %249 = vmatprep.subr.mxu0 0.0
    %250 = vmatpush2.msra.mxu0 0.0
    %251 = vmatprep.subr.mxu0 0.0
    %252 = vmatpush2.msra.mxu0 0.0
    %253 = vmatprep.subr.mxu0 0.0
    %254 = vmatpush2.msra.mxu0 0.0
    %255 = vmatprep.subr.mxu0 0.0
    %256 = vmatpush2.msra.mxu0 0.0
    %257 = vmatprep.subr.mxu0 0.0
    %258 = vmatpush2.msra.mxu0 0.0
    %259 = vmatprep.subr.mxu0 0.0
    %260 = vmatpush2.msra.mxu0 0.0
    %261 = vmatprep.subr.mxu0 0.0
    %262 = vmatpush2.msra.mxu0 0.0
    %263 = vmatprep.subr.mxu0 0.0
    %264 = vmatpush2.msra.mxu0 0.0
    %265 = vmatprep.subr.mxu0 0.0
    %266 = vmatpush2.msra.mxu0 0.0
    %267 = vmatprep.subr.mxu0 0.0
    %268 = vmatpush2.msra.mxu0 0.0
    %269 = vmatprep.subr.mxu0 0.0
    %270 = vmatpush2.msra.mxu0 0.0
    %271 = vmatprep.subr.mxu0 0.0
    %272 = vmatpush2.msra.mxu0 0.0
    %273 = vmatprep.subr.mxu0 0.0
    %274 = vmatpush2.msra.mxu0 0.0
    %275 = vmatprep.subr.mxu0 0.0
    %276 = vmatpush2.msra.mxu0 0.0
    %277 = vmatprep.subr.mxu0 0.0
    %278 = vmatpush2.msra.mxu0 0.0
    %279 = vmatprep.mubr.f32.mxu0 0.0
    %280 = vmatmul.mubr.f32.gmra.mxu0 %v191
    %v281 = vpop.f32.mrf.mxu0
    %v282 = vadd.f32 %v213, %v281
    %v283 = vpop.f32.mrf.mxu0
    %284 = vdwg.mxu0
    %v285 = vmax.f32 %v282, 0.0
    %v286 = vld [vmem:[#allocation8] sm:$0xff]
    %v287 = vld [vmem:[#allocation8 + $0x8] sm:$0xff]
    %v288 = vld [vmem:[#allocation8 + $0x10] sm:$0xff]
    %v289 = vld [vmem:[#allocation8 + $0x18] sm:$0xff]
    %v290 = vld [vmem:[#allocation8 + $0x20] sm:$0xff]
    %v291 = vld [vmem:[#allocation8 + $0x28] sm:$0xff]
    %v292 = vld [vmem:[#allocation8 + $0x30] sm:$0xff]
    %v293 = vld [vmem:[#allocation8 + $0x38] sm:$0xff]
    %v294 = vld [vmem:[#allocation8 + $0x40] sm:$0xff]
    %v295 = vld [vmem:[#allocation8 + $0x48] sm:$0xff]
    %v296 = vld [vmem:[#allocation8 + $0x50] sm:$0xff]
    %v297 = vld [vmem:[#allocation8 + $0x58] sm:$0xff]
    %v298 = vld [vmem:[#allocation8 + $0x60] sm:$0xff]
    %v299 = vld [vmem:[#allocation8 + $0x68] sm:$0xff]
    %v300 = vld [vmem:[#allocation8 + $0x70] sm:$0xff]
    %v301 = vld [vmem:[#allocation8 + $0x78] sm:$0xff]
    %v302 = vld [vmem:[%s6] sm:$0x1]
    %v304 = vlaneseq
    %v305 = vshrl.u32 %v304, 7
    %v306 = vsub.s32 0, %v305
    %v307 = vrot.slane %v302, %v306
    %309 = vmatprep.subr.mxu0 0.0
    %310 = vmatpush1.msra.mxu0 %v301
    %311 = vmatprep.subr.mxu0 0.0
    %312 = vmatpush1.msra.mxu0 %v300
    %313 = vmatprep.subr.mxu0 0.0
    %314 = vmatpush1.msra.mxu0 %v299
    %315 = vmatprep.subr.mxu0 0.0
    %316 = vmatpush1.msra.mxu0 %v298
    %317 = vmatprep.subr.mxu0 0.0
    %318 = vmatpush1.msra.mxu0 %v297
    %319 = vmatprep.subr.mxu0 0.0
    %320 = vmatpush1.msra.mxu0 %v296
    %321 = vmatprep.subr.mxu0 0.0
    %322 = vmatpush1.msra.mxu0 %v295
    %323 = vmatprep.subr.mxu0 0.0
    %324 = vmatpush1.msra.mxu0 %v294
    %325 = vmatprep.subr.mxu0 0.0
    %326 = vmatpush1.msra.mxu0 %v293
    %327 = vmatprep.subr.mxu0 0.0
    %328 = vmatpush1.msra.mxu0 %v292
    %329 = vmatprep.subr.mxu0 0.0
    %330 = vmatpush1.msra.mxu0 %v291
    %331 = vmatprep.subr.mxu0 0.0
    %332 = vmatpush1.msra.mxu0 %v290
    %333 = vmatprep.subr.mxu0 0.0
    %334 = vmatpush1.msra.mxu0 %v289
    %335 = vmatprep.subr.mxu0 0.0
    %336 = vmatpush1.msra.mxu0 %v288
    %337 = vmatprep.subr.mxu0 0.0
    %338 = vmatpush1.msra.mxu0 %v287
    %339 = vmatprep.subr.mxu0 0.0
    %340 = vmatpush1.msra.mxu0 %v286
    %341 = vmatprep.subr.mxu0 0.0
    %342 = vmatpush2.msra.mxu0 0.0
    %343 = vmatprep.subr.mxu0 0.0
    %344 = vmatpush2.msra.mxu0 0.0
    %345 = vmatprep.subr.mxu0 0.0
    %346 = vmatpush2.msra.mxu0 0.0
    %347 = vmatprep.subr.mxu0 0.0
    %348 = vmatpush2.msra.mxu0 0.0
    %349 = vmatprep.subr.mxu0 0.0
    %350 = vmatpush2.msra.mxu0 0.0
    %351 = vmatprep.subr.mxu0 0.0
    %352 = vmatpush2.msra.mxu0 0.0
    %353 = vmatprep.subr.mxu0 0.0
    %354 = vmatpush2.msra.mxu0 0.0
    %355 = vmatprep.subr.mxu0 0.0
    %356 = vmatpush2.msra.mxu0 0.0
    %357 = vmatprep.subr.mxu0 0.0
    %358 = vmatpush2.msra.mxu0 0.0
    %359 = vmatprep.subr.mxu0 0.0
    %360 = vmatpush2.msra.mxu0 0.0
    %361 = vmatprep.subr.mxu0 0.0
    %362 = vmatpush2.msra.mxu0 0.0
    %363 = vmatprep.subr.mxu0 0.0
    %364 = vmatpush2.msra.mxu0 0.0
    %365 = vmatprep.subr.mxu0 0.0
    %366 = vmatpush2.msra.mxu0 0.0
    %367 = vmatprep.subr.mxu0 0.0
    %368 = vmatpush2.msra.mxu0 0.0
    %369 = vmatprep.subr.mxu0 0.0
    %370 = vmatpush2.msra.mxu0 0.0
    %371 = vmatprep.subr.mxu0 0.0
    %372 = vmatpush2.msra.mxu0 0.0
    %373 = vmatprep.mubr.f32.mxu0 0.0
    %374 = vmatmul.mubr.f32.gmra.mxu0 %v285
    %v375 = vpop.f32.mrf.mxu0
    %v376 = vadd.f32 %v307, %v375
    %v377 = vpop.f32.mrf.mxu0
    %378 = vdwg.mxu0
    %v379 = vlaneseq
    %v380 = vand.u32 %v379, 127
    %vm381 = vcmp.lt.s32.totalorder %v380, 10
    %v382 = vsel %vm381, %v376, -1e+30
    %383 = vmax.xlane.f32.xlu0 %v382
    %v384 = vpop.xlane.xlu0 %383
    %v385 = vsub.f32 %v382, %v384
    %v386 = vmul.f32 %v385, 1.442695
    %v387 = vpow.pop %v386
    %388 = vadd.xlane.f32.xlu0 %v387
    %v389 = vpop.xlane.xlu0 %388
    %v390 = vlog2.pop %v389
    %v391 = vmul.f32 %v390, 0.6931472
    %v392 = vsub.f32 %v385, %v391
    %393 = vst [vmem:[#allocation10] sm:$0xff] %v392
    // Predicated region
    $region46: #{tpu_custom_call.1} parent=1 // pred_check
      _
    $region47: #{tpu_custom_call.1} parent=1 // pred_check_branch
      %395 = sbr.rel (0) target = $region49
    $region48: #{tpu_custom_call.1} parent=1 // pred_region
      %s397 = ssub.s32 128, 128
      %398 = vsyncadd [#allocation4], %s397
      %s400 = sshll.u32 [#allocation10], 4
      %s401 = int_to_ptr.vmem [resolvable:$true] %s400
      %403 = dma.vmem_to_hbm [thread:$0]  %s401, 128, %s7, [#allocation4]
    $region49: #{tpu_custom_call.1} parent=1 // pred_fallthru
      _
    // Predicated region
    $region50: #{tpu_custom_call.1} parent=1 // pred_check
      _
    $region51: #{tpu_custom_call.1} parent=1 // pred_check_branch
      %405 = sbr.rel (0) target = $region53
    $region52: #{tpu_custom_call.1} parent=1 // pred_region
      %406 = dma.done [#allocation4], 128
    $region53: #{tpu_custom_call.1} parent=1 // pred_fallthru
      _
    %407 = vsyncpa [#allocation3], 1
    %408 = vsyncpa [#allocation6], 1
    %409 = vsyncpa [#allocation9], 1
    %410 = vsyncpa [#allocation4], 1

</llo_original>
